<compile_context>
chip_gen: v7x
topology: tpu7x:2x2x1
jax: 0.10.0
libtpu: 0.0.40
codegen_flags: <defaults>
</compile_context>

<pallas_src>
import functools

import jax
import jax.numpy as jnp
from jax.experimental import pallas as pl
from jax.experimental.pallas import tpu as pltpu


def _round_up(x, m):
    return ((x + m - 1) // m) * m


# ---------------------------------------------------------------------------
# Kernel 1: scaled feature transform   out = (x @ w) * norm_src   (bf16 out)
# ---------------------------------------------------------------------------
def scaled_linear_kernel(x_ref, w_ref, norm_src_ref, out_ref):
    xw = jnp.dot(x_ref[...], w_ref[...], preferred_element_type=jnp.float32)
    out_ref[...] = (xw * norm_src_ref[...]).astype(out_ref.dtype)


def scaled_linear(x, w, norm_src, *, tm):
    np_, in_p = x.shape
    hout = w.shape[1]
    return pl.pallas_call(
        scaled_linear_kernel,
        out_shape=jax.ShapeDtypeStruct((np_, hout), jnp.bfloat16),
        grid_spec=pltpu.PrefetchScalarGridSpec(
            num_scalar_prefetch=0,
            grid=(np_ // tm,),
            in_specs=[
                pl.BlockSpec((tm, in_p), lambda i: (i, 0)),
                pl.BlockSpec((in_p, hout), lambda i: (0, 0)),
                pl.BlockSpec((tm, 1), lambda i: (i, 0)),
            ],
            out_specs=pl.BlockSpec((tm, hout), lambda i: (i, 0)),
        ),
        compiler_params=pltpu.CompilerParams(
            dimension_semantics=("parallel",),
        ),
    )(x, w, norm_src)


# ---------------------------------------------------------------------------
# Kernel 2: fused layer-1 aggregation + layer-2 feature transform
#   h1[i,:]   = relu( norm_dst[i] * sum_k adj[i,k] * feat1[k,:] + b1 )
#   out[i,:]  = (h1[i,:] @ W2) * norm_src[i]                      (bf16 out)
# grid = (row blocks [parallel], source/reduction blocks [arbitrary, last])
# ---------------------------------------------------------------------------
def agg_fused_kernel(norm_dst_ref, b1_ref, w2_ref, norm_src_ref,
                     adj_ref, feat_ref, out_ref, acc_ref, *, tk):
    k = pl.program_id(1)

    @pl.when(k == 0)
    def _():
        acc_ref[...] = jnp.zeros_like(acc_ref)

    # int8 adj -> bf16 cast (VPU, hides under DMA), bf16 x bf16 -> f32 on MXU.
    # feat is a single VMEM-resident block; slice the current tk-chunk.
    start = pl.multiple_of(k * tk, tk)
    acc_ref[...] += jnp.dot(adj_ref[...].astype(jnp.bfloat16),
                            feat_ref[pl.ds(start, tk), :],
                            preferred_element_type=jnp.float32)

    @pl.when(k == pl.num_programs(1) - 1)
    def _():
        h1 = jnp.maximum(acc_ref[...] * norm_dst_ref[...] + b1_ref[...], 0.0)
        f2 = jnp.dot(h1.astype(jnp.bfloat16), w2_ref[...],
                     preferred_element_type=jnp.float32)
        out_ref[...] = (f2 * norm_src_ref[...]).astype(out_ref.dtype)


def aggregate_fused(adj, feat, norm_dst, norm_src, bias, w_next, *, tm, tk):
    np_ = adj.shape[0]
    hin = feat.shape[1]
    hout = w_next.shape[1]

    flops = 2 * np_ * np_ * hin + 2 * np_ * hin * hout
    bytes_accessed = (np_ * np_ * 1          # int8 adjacency (read once/layer)
                      + np_ * hin * 2        # resident bf16 features (one DMA)
                      + np_ * hout * 2       # bf16 output
                      + hin * hout * 2 + 2 * np_ * 4 + hin * 4)

    return pl.pallas_call(
        functools.partial(agg_fused_kernel, tk=tk),
        out_shape=jax.ShapeDtypeStruct((np_, hout), jnp.bfloat16),
        grid_spec=pltpu.PrefetchScalarGridSpec(
            num_scalar_prefetch=0,
            grid=(np_ // tm, np_ // tk),
            in_specs=[
                pl.BlockSpec((tm, 1), lambda i, k: (i, 0)),       # norm_dst
                pl.BlockSpec((1, hin), lambda i, k: (0, 0)),      # b1
                pl.BlockSpec((hin, hout), lambda i, k: (0, 0)),   # W2 (bf16)
                pl.BlockSpec((tm, 1), lambda i, k: (i, 0)),       # norm_src
                pl.BlockSpec((tm, tk), lambda i, k: (i, k)),      # adj tile i8
                # Full-array, constant index map -> fetched from HBM once and
                # kept VMEM-resident across all grid steps.
                pl.BlockSpec((np_, hin), lambda i, k: (0, 0)),    # feat
            ],
            out_specs=pl.BlockSpec((tm, hout), lambda i, k: (i, 0)),
            scratch_shapes=[pltpu.VMEM((tm, hin), jnp.float32)],
        ),
        compiler_params=pltpu.CompilerParams(
            dimension_semantics=("parallel", "arbitrary"),
            vmem_limit_bytes=48 * 1024 * 1024,   # fits v7x (64 MiB) and v5e/v6e
        ),
        cost_estimate=pl.CostEstimate(flops=flops, transcendentals=0,
                                      bytes_accessed=bytes_accessed),
    )(norm_dst, bias, w_next, norm_src, adj, feat)


# ---------------------------------------------------------------------------
# Kernel 3: final aggregation (layer 2, no activation)
#   out[i,:] = norm_dst[i] * sum_k adj[i,k] * feat2[k,:] + b2      (f32 out)
# ---------------------------------------------------------------------------
def agg_final_kernel(norm_dst_ref, b2_ref, adj_ref, feat_ref, out_ref, acc_ref,
                     *, tk):
    k = pl.program_id(1)

    @pl.when(k == 0)
    def _():
        acc_ref[...] = jnp.zeros_like(acc_ref)

    start = pl.multiple_of(k * tk, tk)
    acc_ref[...] += jnp.dot(adj_ref[...].astype(jnp.bfloat16),
                            feat_ref[pl.ds(start, tk), :],
                            preferred_element_type=jnp.float32)

    @pl.when(k == pl.num_programs(1) - 1)
    def _():
        out_ref[...] = (acc_ref[...] * norm_dst_ref[...]
                        + b2_ref[...]).astype(out_ref.dtype)


def aggregate_final(adj, feat, norm_dst, bias, *, tm, tk):
    np_ = adj.shape[0]
    hout = feat.shape[1]

    flops = 2 * np_ * np_ * hout
    bytes_accessed = (np_ * np_ * 1 + np_ * hout * 2 + np_ * hout * 4
                      + np_ * 4 + hout * 4)

    return pl.pallas_call(
        functools.partial(agg_final_kernel, tk=tk),
        out_shape=jax.ShapeDtypeStruct((np_, hout), jnp.float32),
        grid_spec=pltpu.PrefetchScalarGridSpec(
            num_scalar_prefetch=0,
            grid=(np_ // tm, np_ // tk),
            in_specs=[
                pl.BlockSpec((tm, 1), lambda i, k: (i, 0)),       # norm_dst
                pl.BlockSpec((1, hout), lambda i, k: (0, 0)),     # b2
                pl.BlockSpec((tm, tk), lambda i, k: (i, k)),      # adj tile i8
                pl.BlockSpec((np_, hout), lambda i, k: (0, 0)),   # feat resident
            ],
            out_specs=pl.BlockSpec((tm, hout), lambda i, k: (i, 0)),
            scratch_shapes=[pltpu.VMEM((tm, hout), jnp.float32)],
        ),
        compiler_params=pltpu.CompilerParams(
            dimension_semantics=("parallel", "arbitrary"),
            vmem_limit_bytes=48 * 1024 * 1024,
        ),
        cost_estimate=pl.CostEstimate(flops=flops, transcendentals=0,
                                      bytes_accessed=bytes_accessed),
    )(norm_dst, bias, adj, feat)


# ---------------------------------------------------------------------------
# Full GCN forward.
# ---------------------------------------------------------------------------
def gcn_forward(adj, x, w1, b1, w2, b2, *, tm=512, tk=1024):
    # Padding rule: require one tile to divide the other so node padding is
    # round_up(n, max(tm, tk)) instead of an lcm blowup.
    assert tk % tm == 0 or tm % tk == 0, "require tm | tk or tk | tm"

    n = adj.shape[0]
    in_feats = x.shape[1]
    h_feats = w1.shape[1]
    num_classes = w2.shape[1]

    # Degree norms (DGL norm='both': deg^-1/2 with inf -> 0), precomputed once
    # in wrapper JAX to keep full-N cross-lane reductions out of the kernels.
    adj_f32 = adj.astype(jnp.float32)
    in_deg = jnp.sum(adj_f32, axis=1, keepdims=True)        # [N, 1]  (dst)
    out_deg = jnp.sum(adj_f32, axis=0, keepdims=True).T     # [N, 1]  (src)
    norm_dst = jnp.where(in_deg > 0, jax.lax.rsqrt(in_deg), 0.0)
    norm_src = jnp.where(out_deg > 0, jax.lax.rsqrt(out_deg), 0.0)

    # Pad node count to a tile multiple and feature widths to 128 lanes.
    tile_n = max(tm, tk)
    np_ = _round_up(n, tile_n)
    in_p = _round_up(in_feats, 128)
    hp = _round_up(h_feats, 128)
    cp = _round_up(num_classes, 128)

    # int8 adjacency (0/1 exact) -> half the HBM traffic of bf16.
    adj_p = jnp.zeros((np_, np_), jnp.int8).at[:n, :n].set(
        adj_f32.astype(jnp.int8))
    x_p = jnp.zeros((np_, in_p), jnp.float32).at[:n, :in_feats].set(x)
    w1_p = jnp.zeros((in_p, hp), jnp.float32).at[:in_feats, :h_feats].set(w1)
    b1_p = jnp.zeros((1, hp), jnp.float32).at[:, :h_feats].set(b1.reshape(1, -1))
    w2_p = jnp.zeros((hp, cp), jnp.bfloat16).at[:h_feats, :num_classes].set(
        w2.astype(jnp.bfloat16))
    b2_p = jnp.zeros((1, cp), jnp.float32).at[:, :num_classes].set(b2.reshape(1, -1))
    norm_dst_p = jnp.zeros((np_, 1), jnp.float32).at[:n].set(norm_dst)
    norm_src_p = jnp.zeros((np_, 1), jnp.float32).at[:n].set(norm_src)

    # Layer 1 feature transform: feat1 = (X @ W1) * norm_src          (bf16)
    feat1 = scaled_linear(x_p, w1_p, norm_src_p, tm=tm)
    # Layer 1 aggregate fused with layer-2 transform:
    #   feat2 = (relu(norm_dst * (A @ feat1) + b1) @ W2) * norm_src   (bf16)
    feat2 = aggregate_fused(adj_p, feat1, norm_dst_p, norm_src_p, b1_p, w2_p,
                            tm=tm, tk=tk)
    # Layer 2 aggregate: out = norm_dst * (A @ feat2) + b2            (f32)
    out = aggregate_final(adj_p, feat2, norm_dst_p, b2_p, tm=tm, tk=tk)

    return out[:n, :num_classes]


def glorot_uniform(key, shape):
    fan_in, fan_out = shape
    limit = (6.0 / (fan_in + fan_out)) ** 0.5
    return jax.random.uniform(key, shape, jnp.float32, -limit, limit)


if __name__ == "__main__":
    N = 300           # number of graph nodes (padded to 384 internally)
    IN_FEATS = 8
    H_FEATS = 32
    NUM_CLASSES = 4
    TM = 128          # row-block tile (small test sizes; defaults are 512/1024)
    TK = 128          # source/reduction tile

    key = jax.random.PRNGKey(0)
    k_adj, k_x, k_w1, k_w2 = jax.random.split(key, 4)

    # Synthetic undirected graph with self-loops (guarantees nonzero degrees).
    rand = jax.random.uniform(k_adj, (N, N))
    adj = (rand < 0.3).astype(jnp.float32)
    adj = jnp.maximum(adj, adj.T)                              # symmetrize
    adj = jnp.maximum(adj, jnp.eye(N, dtype=jnp.float32))      # self-loops

    x = jax.random.normal(k_x, (N, IN_FEATS), jnp.float32)

    # DGL GraphConv init: Xavier-uniform weight, zero bias.
    w1 = glorot_uniform(k_w1, (IN_FEATS, H_FEATS))
    b1 = jnp.zeros((1, H_FEATS), jnp.float32)
    w2 = glorot_uniform(k_w2, (H_FEATS, NUM_CLASSES))
    b2 = jnp.zeros((1, NUM_CLASSES), jnp.float32)

    out = gcn_forward(adj, x, w1, b1, w2, b2, tm=TM, tk=TK)
    jax.block_until_ready(out)

    # Pure-JAX (f32) reference check.
    in_deg = jnp.sum(adj, axis=1, keepdims=True)
    out_deg = jnp.sum(adj, axis=0, keepdims=True)
    nd = jnp.where(in_deg > 0, 1.0 / jnp.sqrt(in_deg), 0.0)
    ns = jnp.where(out_deg > 0, 1.0 / jnp.sqrt(out_deg), 0.0)
    a_hat = nd * adj * ns
    h1_ref = jnp.maximum(a_hat @ (x @ w1) + b1, 0.0)
    ref = a_hat @ (h1_ref @ w2) + b2

    rel_err = jnp.linalg.norm(out - ref) / jnp.linalg.norm(ref)
    assert out.shape == (N, NUM_CLASSES)
    assert jnp.allclose(out, ref, atol=1e-2, rtol=1e-2), (
        f"mismatch vs reference (rel_err={rel_err})")
    assert rel_err < 3e-2, f"mismatch vs reference: rel_err={rel_err}"
    print("KERNEL_OK")
</pallas_src>

<mosaic_0001>
module attributes {stable_mosaic.version = 11 : i64} {
  func.func @scaled_linear_kernel(%arg0: i32, %arg1: memref<128x128xf32, #tpu.memory_space<vmem>>, %arg2: memref<128x128xf32, #tpu.memory_space<vmem>>, %arg3: memref<128x1xf32, #tpu.memory_space<vmem>>, %arg4: memref<128x128xbf16, #tpu.memory_space<vmem>>) attributes {dimension_semantics = [#tpu.dimension_semantics<parallel>], iteration_bounds = array<i64: 3>, scalar_prefetch = 0 : i64, scratch_operands = 0 : i64, tpu.core_type = #tpu.core_type<tc>, window_params = [{transform_indices = @transform_0, window_bounds = array<i64: 128, 128>}, {pipeline_mode = #tpu.pipeline_mode<synchronous>, transform_indices = @transform_1, window_bounds = array<i64: 128, 128>}, {transform_indices = @transform_2, window_bounds = array<i64: 128, 1>}, {transform_indices = @transform_3, window_bounds = array<i64: 128, 128>}]} {
    %c0 = arith.constant 0 : index
    %c0_0 = arith.constant 0 : index
    %0 = vector.load %arg1[%c0, %c0_0] : memref<128x128xf32, #tpu.memory_space<vmem>>, vector<128x128xf32>
    %c0_1 = arith.constant 0 : index
    %c0_2 = arith.constant 0 : index
    %1 = vector.load %arg2[%c0_1, %c0_2] : memref<128x128xf32, #tpu.memory_space<vmem>>, vector<128x128xf32>
    %cst = arith.constant dense<0.000000e+00> : vector<128x128xf32>
    %2 = tpu.matmul %0, %1, %cst {dimension_numbers = #tpu.dot_dimension_numbers<[1], [0], [0], [1], [0, 0, 1, 1], [], []>} : vector<128x128xf32>, vector<128x128xf32>, vector<128x128xf32> -> vector<128x128xf32>
    %c0_3 = arith.constant 0 : index
    %c0_4 = arith.constant 0 : index
    %3 = vector.load %arg3[%c0_3, %c0_4] : memref<128x1xf32, #tpu.memory_space<vmem>>, vector<128x1xf32>
    %4 = vector.broadcast %3 : vector<128x1xf32> to vector<128x128xf32>
    %5 = arith.mulf %2, %4 : vector<128x128xf32>
    %6 = arith.truncf %5 : vector<128x128xf32> to vector<128x128xbf16>
    %c0_5 = arith.constant 0 : index
    %c0_6 = arith.constant 0 : index
    %7 = vector.load %arg4[%c0_5, %c0_6] : memref<128x128xbf16, #tpu.memory_space<vmem>>, vector<128x128xbf16>
    tpu.vector_store %arg4[%c0_5, %c0_6], %6 {strides = array<i32>} : memref<128x128xbf16, #tpu.memory_space<vmem>>, vector<128x128xbf16>,
    return
  }
  func.func @transform_0(%arg0: i32) -> (i32, i32) {
    %c0_i32 = arith.constant 0 : i32
    %c0_i32_0 = arith.constant 0 : i32
    return %arg0, %c0_i32 : i32, i32
  }
  func.func @transform_1(%arg0: i32) -> (i32, i32) {
    %c0_i32 = arith.constant 0 : i32
    %c0_i32_0 = arith.constant 0 : i32
    %c0_i32_1 = arith.constant 0 : i32
    return %c0_i32, %c0_i32_0 : i32, i32
  }
  func.func @transform_2(%arg0: i32) -> (i32, i32) {
    %c0_i32 = arith.constant 0 : i32
    %c0_i32_0 = arith.constant 0 : i32
    return %arg0, %c0_i32 : i32, i32
  }
  func.func @transform_3(%arg0: i32) -> (i32, i32) {
    %c0_i32 = arith.constant 0 : i32
    %c0_i32_0 = arith.constant 0 : i32
    return %arg0, %c0_i32 : i32, i32
  }
}

</mosaic_0001>

<llo_original>
// kernel: tpu_custom_call.1
$region0: #{tpu_custom_call.1}
  #allocation0 [shape = 'u32[]', space=smem, size = 0x4, offset = 0x4, fixed_abs, tag = 'smem constant byte address 0x4 - core index']
  #allocation1 [shape = 'u32[144,128]{1,0:T(1,128)}', space=vmem, size = 0x12000, scoped, tag = 'internal scratch']
  %s0 = inlined_call_operand.vmem [shape: f32[384,128], index: 0, kind: input, shape index: {}]
  %s1 = inlined_call_operand.hbm [shape: f32[128,128], index: 1, kind: input, shape index: {}]
  %s2 = inlined_call_operand.vmem [shape: f32[384,1], index: 2, kind: input, shape index: {}]
  %s3 = inlined_call_operand.hbm [shape: bf16[384,128], index: 3, kind: output, shape index: {}]
  %s4 = sld [smem:[#allocation0]]
  $region49: #{tpu_custom_call.1} parent=0
    _
  %s6 = ssub.s32 1, %s4
  %s7 = scalar_select 0, %s6, %s4
  $region1: #{tpu_custom_call.1} parent=0
    #allocation2 [shape = 'u8[65536]{0}', space=vmem, size = 0x10000, scoped, tag = 'input window, operand 1, single buffered']
    #allocation3 [shape = 's32[2]{0}', space=sflag, size = 0x8, scoped, tag = 'scoped memory for tpu_custom_call.1']
    #allocation4 [shape = 's32[2]{0}', space=sflag, size = 0x8, scoped, tag = 'scoped memory for tpu_custom_call.1']
    #allocation5 [shape = 'u8[65536]{0}', space=vmem, size = 0x10000, scoped, tag = 'output window, operand 0']
    %8 = vsyncpa [#allocation3], 0
    %9 = vsyncpa [#allocation4], 0
    %s10 = scalar_lea.sflag [#allocation4], 1
    %11 = vsyncpa %s10, 0
    loop: start=0, step=1, limit=5
    $region2: #{tpu_custom_call.1} parent=1 // loop_pre_header
      _
    $region3: #{tpu_custom_call.1} parent=1 // loop_header
      %s13 = sphi 0, %s17
      %p14 = scmp.ge.s32.totalorder %s13, 5
      %s23 = sphi 0, %s25
      %s26 = sphi 0, %s23
      %s27 = sphi 0, %s26
      %s43 = sphi 0, %s27
      %s47 = sphi 0, %s47
      %s49 = sphi 0, %s47
      %s50 = sphi 0, %s49
      %s64 = sphi 0, %s50
      %s70 = sphi 0, %s72
      %s73 = sphi 0, %s70
      %s74 = sphi 0, %s73
      %s90 = sphi 0, %s74
      %s96 = sphi 0, %s98
      %s99 = sphi 0, %s96
      %s100 = sphi 0, %s99
      %s116 = sphi 0, %s100
    $region4: #{tpu_custom_call.1} parent=1 // loop_header_branch
      %16 = sbr.rel (%p14) target = $region8
    $region5: #{tpu_custom_call.1} parent=1 // loop_body
      %s18 = ssub.s32 %s13, 1
      %s19 = ssub.s32 %s13, 2
      %s20 = sadd.s32 %s13, 1
      %s21 = ssub.s32 %s13, %s20
      %p22 = scmp.eq.s32.totalorder %s21, 0
      %s24 = sadd.s32 %s23, 1
      %s25 = scalar_select %p22, %s23, %s24
      %p28 = pneg %p22
      %p29 = scmp.eq.s32.totalorder %s13, 2
      %p30 = por %p28, %p29
      %p31 = scmp.ne.s32.totalorder %s23, %s26
      %p32 = scmp.eq.s32.totalorder %s13, 0
      %p33 = por %p31, %p32
      %p34 = scmp.ne.s32.totalorder %s23, %s26
      %p35 = scmp.eq.s32.totalorder %s18, 2
      %p36 = por %p34, %p35
      %p37 = scmp.ne.s32.totalorder %s26, %s27
      %p38 = scmp.eq.s32.totalorder %s18, 0
      %p39 = por %p37, %p38
      %p40 = scmp.ne.s32.totalorder %s26, %s27
      %p41 = scmp.eq.s32.totalorder %s19, 2
      %p42 = por %p40, %p41
      %p44 = scmp.ne.s32.totalorder %s27, %s43
      %p45 = scmp.eq.s32.totalorder %s19, 0
      %p46 = por %p44, %p45
      %s48 = sadd.s32 %s47, 1
      %p51 = scmp.eq.s32.totalorder %s13, 2
      %p52 = scmp.ne.s32.totalorder %s47, %s49
      %p53 = scmp.eq.s32.totalorder %s13, 0
      %p54 = por %p52, %p53
      %p55 = scmp.ne.s32.totalorder %s47, %s49
      %p56 = scmp.eq.s32.totalorder %s18, 2
      %p57 = por %p55, %p56
      %p58 = scmp.ne.s32.totalorder %s49, %s50
      %p59 = scmp.eq.s32.totalorder %s18, 0
      %p60 = por %p58, %p59
      %p61 = scmp.ne.s32.totalorder %s49, %s50
      %p62 = scmp.eq.s32.totalorder %s19, 2
      %p63 = por %p61, %p62
      %p65 = scmp.ne.s32.totalorder %s50, %s64
      %p66 = scmp.eq.s32.totalorder %s19, 0
      %p67 = por %p65, %p66
      %s68 = ssub.s32 %s13, %s20
      %p69 = scmp.eq.s32.totalorder %s68, 0
      %s71 = sadd.s32 %s70, 1
      %s72 = scalar_select %p69, %s70, %s71
      %p75 = pneg %p69
      %p76 = scmp.eq.s32.totalorder %s13, 2
      %p77 = por %p75, %p76
      %p78 = scmp.ne.s32.totalorder %s70, %s73
      %p79 = scmp.eq.s32.totalorder %s13, 0
      %p80 = por %p78, %p79
      %p81 = scmp.ne.s32.totalorder %s70, %s73
      %p82 = scmp.eq.s32.totalorder %s18, 2
      %p83 = por %p81, %p82
      %p84 = scmp.ne.s32.totalorder %s73, %s74
      %p85 = scmp.eq.s32.totalorder %s18, 0
      %p86 = por %p84, %p85
      %p87 = scmp.ne.s32.totalorder %s73, %s74
      %p88 = scmp.eq.s32.totalorder %s19, 2
      %p89 = por %p87, %p88
      %p91 = scmp.ne.s32.totalorder %s74, %s90
      %p92 = scmp.eq.s32.totalorder %s19, 0
      %p93 = por %p91, %p92
      %s94 = ssub.s32 %s13, %s20
      %p95 = scmp.eq.s32.totalorder %s94, 0
      %s97 = sadd.s32 %s96, 1
      %s98 = scalar_select %p95, %s96, %s97
      %p101 = pneg %p95
      %p102 = scmp.eq.s32.totalorder %s13, 2
      %p103 = por %p101, %p102
      %p104 = scmp.ne.s32.totalorder %s96, %s99
      %p105 = scmp.eq.s32.totalorder %s13, 0
      %p106 = por %p104, %p105
      %p107 = scmp.ne.s32.totalorder %s96, %s99
      %p108 = scmp.eq.s32.totalorder %s18, 2
      %p109 = por %p107, %p108
      %p110 = scmp.ne.s32.totalorder %s99, %s100
      %p111 = scmp.eq.s32.totalorder %s18, 0
      %p112 = por %p110, %p111
      %p113 = scmp.ne.s32.totalorder %s99, %s100
      %p114 = scmp.eq.s32.totalorder %s19, 2
      %p115 = por %p113, %p114
      %p117 = scmp.ne.s32.totalorder %s100, %s116
      %p118 = scmp.eq.s32.totalorder %s19, 0
      %p119 = por %p117, %p118
      %p120 = scmp.le.s32.totalorder 1, %s13
      %p121 = scmp.lt.s32.totalorder %s13, 4
      %p122 = pnand %p120, %p121
      %p123 = pneg %p122
      // Predicated region
      $region9: #{tpu_custom_call.1} parent=5 // pred_check
        _
      $region10: #{tpu_custom_call.1} parent=5 // pred_check_branch
        %125 = sbr.rel (%p122) target = $region12
      $region11: #{tpu_custom_call.1} parent=5 // pred_region
        %s126 = ssub.s32 %s13, 1
        // Predicated region
        $region13: #{tpu_custom_call.1} parent=11 // pred_check
          %p127 = pneg %p60
        $region14: #{tpu_custom_call.1} parent=11 // pred_check_branch
          %129 = sbr.rel (%p127) target = $region16
        $region15: #{tpu_custom_call.1} parent=11 // pred_region
          %s131 = ssub.s32 2048, 2048
          %132 = vsyncadd [#allocation3], %s131
          %s133 = sshll.u32 [#allocation2], 4
          %s134 = int_to_ptr.vmem [resolvable:$true] %s133
          %139 = dma.hbm_to_vmem [thread:$0]  %s1, 2048, %s134, [#allocation3], 128, 128, 8
        $region16: #{tpu_custom_call.1} parent=11 // pred_fallthru
          _
      $region12: #{tpu_custom_call.1} parent=5 // pred_fallthru
        _
      %p140 = scmp.lt.s32.totalorder %s13, 3
      // Predicated region
      $region17: #{tpu_custom_call.1} parent=5 // pred_check
        %p141 = pneg %p140
      $region18: #{tpu_custom_call.1} parent=5 // pred_check_branch
        %143 = sbr.rel (%p141) target = $region20
      $region19: #{tpu_custom_call.1} parent=5 // pred_region
        // Predicated region
        $region21: #{tpu_custom_call.1} parent=19 // pred_check
          %p144 = pneg %p33
        $region22: #{tpu_custom_call.1} parent=19 // pred_check_branch
          %146 = sbr.rel (%p144) target = $region24
        $region23: #{tpu_custom_call.1} parent=19 // pred_region
          %s147 = smul.u32 16, %s13
          %p148 = scmp.lt.s32.totalorder %s147, 47
          %s149 = scalar_select %p148, %s147, 47
          %s150 = smul.addr %s149, 8
          %s151 = scalar_lea.vmem %s0, %s150
          %s152 = smul.u32 16, %s13
        $region24: #{tpu_custom_call.1} parent=19 // pred_fallthru
          _
        // Predicated region
        $region25: #{tpu_custom_call.1} parent=19 // pred_check
          %p153 = pneg %p80
        $region26: #{tpu_custom_call.1} parent=19 // pred_check_branch
          %155 = sbr.rel (%p153) target = $region28
        $region27: #{tpu_custom_call.1} parent=19 // pred_region
          %s156 = smul.u32 16, %s13
          %p157 = scmp.lt.s32.totalorder %s156, 47
          %s158 = scalar_select %p157, %s156, 47
          %s159 = smul.addr %s158, 8
          %s160 = scalar_lea.vmem %s2, %s159
          %s161 = smul.u32 16, %s13
        $region28: #{tpu_custom_call.1} parent=19 // pred_fallthru
          _
      $region20: #{tpu_custom_call.1} parent=5 // pred_fallthru
        _
      %p162 = scmp.le.s32.totalorder 1, %s13
      %p163 = scmp.lt.s32.totalorder %s13, 4
      %p164 = pnand %p162, %p163
      %p165 = pneg %p164
      // Predicated region
      $region29: #{tpu_custom_call.1} parent=5 // pred_check
        _
      $region30: #{tpu_custom_call.1} parent=5 // pred_check_branch
        %167 = sbr.rel (%p164) target = $region32
      $region31: #{tpu_custom_call.1} parent=5 // pred_region
        %s168 = ssub.s32 %s13, 1
        // Predicated region
        $region33: #{tpu_custom_call.1} parent=31 // pred_check
          %p169 = pneg %p60
        $region34: #{tpu_custom_call.1} parent=31 // pred_check_branch
          %171 = sbr.rel (%p169) target = $region36
        $region35: #{tpu_custom_call.1} parent=31 // pred_region
          %172 = dma.done [#allocation3], 2048
        $region36: #{tpu_custom_call.1} parent=31 // pred_fallthru
          _
        %s173 = smul.u32 16, %s18
        %p174 = scmp.lt.s32.totalorder %s173, 47
        %s175 = scalar_select %p174, %s173, 47
        %s176 = smul.addr %s175, 8
        %s177 = scalar_lea.vmem %s0, %s176
        %p178 = pneg %p39
        %p179 = pneg %p36
        %p180 = pneg %p60
        %p181 = pneg %p57
        %s182 = smul.u32 16, %s18
        %p183 = scmp.lt.s32.totalorder %s182, 47
        %s184 = scalar_select %p183, %s182, 47
        %s185 = smul.addr %s184, 8
        %s186 = scalar_lea.vmem %s2, %s185
        %p187 = pneg %p86
        %p188 = pneg %p83
        %p189 = pneg %p112
        %p190 = pneg %p109
        %s191 = sand.u32 %s99, 1
        %s192 = scalar_lea.sflag [#allocation4], %s191
        %s193 = sand.u32 %s99, 1
        %s194 = smul.addr %s193, 64
        %s195 = scalar_lea.vmem [#allocation5], %s194
        %s196 = smul.u32 16, %s18
        %p197 = scmp.lt.s32.totalorder %s196, 47
        %s198 = scalar_select %p197, %s196, 47
        %s199 = smul.addr %s198, 8
        %s200 = scalar_lea.vmem %s0, %s199
        %s201 = smul.u32 16, %s18
        %s202 = smul.u32 16, %s18
        %p203 = scmp.lt.s32.totalorder %s202, 47
        %s204 = scalar_select %p203, %s202, 47
        %s205 = smul.addr %s204, 8
        %s206 = scalar_lea.vmem %s2, %s205
        %s207 = smul.u32 16, %s18
        %s208 = smul.u32 16, %s18
        %v209 = vld [vmem:[%s200] sm:$0xff]
        %v210 = vld [vmem:[%s200 + $0x8] sm:$0xff]
        %v211 = vld [vmem:[%s200 + $0x10] sm:$0xff]
        %v212 = vld [vmem:[%s200 + $0x18] sm:$0xff]
        %v213 = vld [vmem:[%s200 + $0x20] sm:$0xff]
        %v214 = vld [vmem:[%s200 + $0x28] sm:$0xff]
        %v215 = vld [vmem:[%s200 + $0x30] sm:$0xff]
        %v216 = vld [vmem:[%s200 + $0x38] sm:$0xff]
        %v217 = vld [vmem:[%s200 + $0x40] sm:$0xff]
        %v218 = vld [vmem:[%s200 + $0x48] sm:$0xff]
        %v219 = vld [vmem:[%s200 + $0x50] sm:$0xff]
        %v220 = vld [vmem:[%s200 + $0x58] sm:$0xff]
        %v221 = vld [vmem:[%s200 + $0x60] sm:$0xff]
        %v222 = vld [vmem:[%s200 + $0x68] sm:$0xff]
        %v223 = vld [vmem:[%s200 + $0x70] sm:$0xff]
        %v224 = vld [vmem:[%s200 + $0x78] sm:$0xff]
        %v225 = vld [vmem:[#allocation2] sm:$0xff]
        %v226 = vld [vmem:[#allocation2 + $0x8] sm:$0xff]
        %v227 = vld [vmem:[#allocation2 + $0x10] sm:$0xff]
        %v228 = vld [vmem:[#allocation2 + $0x18] sm:$0xff]
        %v229 = vld [vmem:[#allocation2 + $0x20] sm:$0xff]
        %v230 = vld [vmem:[#allocation2 + $0x28] sm:$0xff]
        %v231 = vld [vmem:[#allocation2 + $0x30] sm:$0xff]
        %v232 = vld [vmem:[#allocation2 + $0x38] sm:$0xff]
        %v233 = vld [vmem:[#allocation2 + $0x40] sm:$0xff]
        %v234 = vld [vmem:[#allocation2 + $0x48] sm:$0xff]
        %v235 = vld [vmem:[#allocation2 + $0x50] sm:$0xff]
        %v236 = vld [vmem:[#allocation2 + $0x58] sm:$0xff]
        %v237 = vld [vmem:[#allocation2 + $0x60] sm:$0xff]
        %v238 = vld [vmem:[#allocation2 + $0x68] sm:$0xff]
        %v239 = vld [vmem:[#allocation2 + $0x70] sm:$0xff]
        %v240 = vld [vmem:[#allocation2 + $0x78] sm:$0xff]
        %241 = vmatprep.subr.mxu0 0.0
        %242 = vmatpush1.msra.mxu0 %v225
        %243 = vmatprep.subr.mxu0 0.0
        %244 = vmatpush1.msra.mxu0 %v226
        %245 = vmatprep.subr.mxu0 0.0
        %246 = vmatpush1.msra.mxu0 %v227
        %247 = vmatprep.subr.mxu0 0.0
        %248 = vmatpush1.msra.mxu0 %v228
        %249 = vmatprep.subr.mxu0 0.0
        %250 = vmatpush1.msra.mxu0 %v229
        %251 = vmatprep.subr.mxu0 0.0
        %252 = vmatpush1.msra.mxu0 %v230
        %253 = vmatprep.subr.mxu0 0.0
        %254 = vmatpush1.msra.mxu0 %v231
        %255 = vmatprep.subr.mxu0 0.0
        %256 = vmatpush1.msra.mxu0 %v232
        %257 = vmatprep.subr.mxu0 0.0
        %258 = vmatpush1.msra.mxu0 %v233
        %259 = vmatprep.subr.mxu0 0.0
        %260 = vmatpush1.msra.mxu0 %v234
        %261 = vmatprep.subr.mxu0 0.0
        %262 = vmatpush1.msra.mxu0 %v235
        %263 = vmatprep.subr.mxu0 0.0
        %264 = vmatpush1.msra.mxu0 %v236
        %265 = vmatprep.subr.mxu0 0.0
        %266 = vmatpush1.msra.mxu0 %v237
        %267 = vmatprep.subr.mxu0 0.0
        %268 = vmatpush1.msra.mxu0 %v238
        %269 = vmatprep.subr.mxu0 0.0
        %270 = vmatpush1.msra.mxu0 %v239
        %271 = vmatprep.subr.mxu0 0.0
        %272 = vmatpush1.msra.mxu0 %v240
        %273 = vmatprep.subr.mxu0 0.0
        %274 = vmatpush1.msra.mxu0 0.0
        %275 = vmatprep.subr.mxu0 0.0
        %276 = vmatpush1.msra.mxu0 0.0
        %277 = vmatprep.subr.mxu0 0.0
        %278 = vmatpush1.msra.mxu0 0.0
        %279 = vmatprep.subr.mxu0 0.0
        %280 = vmatpush1.msra.mxu0 0.0
        %281 = vmatprep.subr.mxu0 0.0
        %282 = vmatpush1.msra.mxu0 0.0
        %283 = vmatprep.subr.mxu0 0.0
        %284 = vmatpush1.msra.mxu0 0.0
        %285 = vmatprep.subr.mxu0 0.0
        %286 = vmatpush1.msra.mxu0 0.0
        %287 = vmatprep.subr.mxu0 0.0
        %288 = vmatpush1.msra.mxu0 0.0
        %289 = vmatprep.subr.mxu0 0.0
        %290 = vmatpush1.msra.mxu0 0.0
        %291 = vmatprep.subr.mxu0 0.0
        %292 = vmatpush1.msra.mxu0 0.0
        %293 = vmatprep.subr.mxu0 0.0
        %294 = vmatpush1.msra.mxu0 0.0
        %295 = vmatprep.subr.mxu0 0.0
        %296 = vmatpush1.msra.mxu0 0.0
        %297 = vmatprep.subr.mxu0 0.0
        %298 = vmatpush1.msra.mxu0 0.0
        %299 = vmatprep.subr.mxu0 0.0
        %300 = vmatpush1.msra.mxu0 0.0
        %301 = vmatprep.subr.mxu0 0.0
        %302 = vmatpush1.msra.mxu0 0.0
        %303 = vmatprep.subr.mxu0 0.0
        %304 = vmatpush1.msra.mxu0 0.0
        %305 = vmatprep.mubr.f32.mxu0 0.0
        %306 = vmatmul.mubr.f32.gmra.mrb[0].mxu0 %v209
        %v307 = vpop.f32.mrb[0].mxu0
        %v308 = vadd.f32 0.0, %v307
        %v309 = vpop.f32.mrb[0].mxu0
        %310 = vmatprep.mubr.f32.mxu0 0.0
        %311 = vmatmul.mubr.f32.gmra.mrb[0].mxu0 %v210
        %v312 = vpop.f32.mrb[0].mxu0
        %v313 = vadd.f32 0.0, %v312
        %v314 = vpop.f32.mrb[0].mxu0
        %315 = vmatprep.mubr.f32.mxu0 0.0
        %316 = vmatmul.mubr.f32.gmra.mrb[0].mxu0 %v211
        %v317 = vpop.f32.mrb[0].mxu0
        %v318 = vadd.f32 0.0, %v317
        %v319 = vpop.f32.mrb[0].mxu0
        %320 = vmatprep.mubr.f32.mxu0 0.0
        %321 = vmatmul.mubr.f32.gmra.mrb[0].mxu0 %v212
        %v322 = vpop.f32.mrb[0].mxu0
        %v323 = vadd.f32 0.0, %v322
        %v324 = vpop.f32.mrb[0].mxu0
        %325 = vmatprep.mubr.f32.mxu0 0.0
        %326 = vmatmul.mubr.f32.gmra.mrb[0].mxu0 %v213
        %v327 = vpop.f32.mrb[0].mxu0
        %v328 = vadd.f32 0.0, %v327
        %v329 = vpop.f32.mrb[0].mxu0
        %330 = vmatprep.mubr.f32.mxu0 0.0
        %331 = vmatmul.mubr.f32.gmra.mrb[0].mxu0 %v214
        %v332 = vpop.f32.mrb[0].mxu0
        %v333 = vadd.f32 0.0, %v332
        %v334 = vpop.f32.mrb[0].mxu0
        %335 = vmatprep.mubr.f32.mxu0 0.0
        %336 = vmatmul.mubr.f32.gmra.mrb[0].mxu0 %v215
        %v337 = vpop.f32.mrb[0].mxu0
        %v338 = vadd.f32 0.0, %v337
        %v339 = vpop.f32.mrb[0].mxu0
        %340 = vmatprep.mubr.f32.mxu0 0.0
        %341 = vmatmul.mubr.f32.gmra.mrb[0].mxu0 %v216
        %v342 = vpop.f32.mrb[0].mxu0
        %v343 = vadd.f32 0.0, %v342
        %v344 = vpop.f32.mrb[0].mxu0
        %345 = vmatprep.mubr.f32.mxu0 0.0
        %346 = vmatmul.mubr.f32.gmra.mrb[0].mxu0 %v217
        %v347 = vpop.f32.mrb[0].mxu0
        %v348 = vadd.f32 0.0, %v347
        %v349 = vpop.f32.mrb[0].mxu0
        %350 = vmatprep.mubr.f32.mxu0 0.0
        %351 = vmatmul.mubr.f32.gmra.mrb[0].mxu0 %v218
        %v352 = vpop.f32.mrb[0].mxu0
        %v353 = vadd.f32 0.0, %v352
        %v354 = vpop.f32.mrb[0].mxu0
        %355 = vmatprep.mubr.f32.mxu0 0.0
        %356 = vmatmul.mubr.f32.gmra.mrb[0].mxu0 %v219
        %v357 = vpop.f32.mrb[0].mxu0
        %v358 = vadd.f32 0.0, %v357
        %v359 = vpop.f32.mrb[0].mxu0
        %360 = vmatprep.mubr.f32.mxu0 0.0
        %361 = vmatmul.mubr.f32.gmra.mrb[0].mxu0 %v220
        %v362 = vpop.f32.mrb[0].mxu0
        %v363 = vadd.f32 0.0, %v362
        %v364 = vpop.f32.mrb[0].mxu0
        %365 = vmatprep.mubr.f32.mxu0 0.0
        %366 = vmatmul.mubr.f32.gmra.mrb[0].mxu0 %v221
        %v367 = vpop.f32.mrb[0].mxu0
        %v368 = vadd.f32 0.0, %v367
        %v369 = vpop.f32.mrb[0].mxu0
        %370 = vmatprep.mubr.f32.mxu0 0.0
        %371 = vmatmul.mubr.f32.gmra.mrb[0].mxu0 %v222
        %v372 = vpop.f32.mrb[0].mxu0
        %v373 = vadd.f32 0.0, %v372
        %v374 = vpop.f32.mrb[0].mxu0
        %375 = vmatprep.mubr.f32.mxu0 0.0
        %376 = vmatmul.mubr.f32.gmra.mrb[0].mxu0 %v223
        %v377 = vpop.f32.mrb[0].mxu0
        %v378 = vadd.f32 0.0, %v377
        %v379 = vpop.f32.mrb[0].mxu0
        %380 = vmatprep.mubr.f32.mxu0 0.0
        %381 = vmatmul.mubr.f32.gmra.mrb[0].mxu0 %v224
        %v382 = vpop.f32.mrb[0].mxu0
        %v383 = vadd.f32 0.0, %v382
        %v384 = vpop.f32.mrb[0].mxu0
        %385 = vdwg.mxu0
        %v386 = vld [vmem:[%s206] sm:$0xff]
        %v387 = vld [vmem:[%s206 + $0x8] sm:$0xff]
        %v388 = vld [vmem:[%s206 + $0x10] sm:$0xff]
        %v389 = vld [vmem:[%s206 + $0x18] sm:$0xff]
        %v390 = vld [vmem:[%s206 + $0x20] sm:$0xff]
        %v391 = vld [vmem:[%s206 + $0x28] sm:$0xff]
        %v392 = vld [vmem:[%s206 + $0x30] sm:$0xff]
        %v393 = vld [vmem:[%s206 + $0x38] sm:$0xff]
        %v394 = vld [vmem:[%s206 + $0x40] sm:$0xff]
        %v395 = vld [vmem:[%s206 + $0x48] sm:$0xff]
        %v396 = vld [vmem:[%s206 + $0x50] sm:$0xff]
        %v397 = vld [vmem:[%s206 + $0x58] sm:$0xff]
        %v398 = vld [vmem:[%s206 + $0x60] sm:$0xff]
        %v399 = vld [vmem:[%s206 + $0x68] sm:$0xff]
        %v400 = vld [vmem:[%s206 + $0x70] sm:$0xff]
        %v401 = vld [vmem:[%s206 + $0x78] sm:$0xff]
        %403 = vset.pattern.permute.xlu0 0
        %404 = vperm.xlu0 %403, %v386
        %v405 = vpop.permute.xlu0 %404
        %408 = vset.pattern.permute.xlu0 0
        %409 = vperm.xlu0 %408, %v387
        %v410 = vpop.permute.xlu0 %409
        %413 = vset.pattern.permute.xlu0 0
        %414 = vperm.xlu0 %413, %v388
        %v415 = vpop.permute.xlu0 %414
        %418 = vset.pattern.permute.xlu0 0
        %419 = vperm.xlu0 %418, %v389
        %v420 = vpop.permute.xlu0 %419
        %423 = vset.pattern.permute.xlu0 0
        %424 = vperm.xlu0 %423, %v390
        %v425 = vpop.permute.xlu0 %424
        %428 = vset.pattern.permute.xlu0 0
        %429 = vperm.xlu0 %428, %v391
        %v430 = vpop.permute.xlu0 %429
        %433 = vset.pattern.permute.xlu0 0
        %434 = vperm.xlu0 %433, %v392
        %v435 = vpop.permute.xlu0 %434
        %438 = vset.pattern.permute.xlu0 0
        %439 = vperm.xlu0 %438, %v393
        %v440 = vpop.permute.xlu0 %439
        %443 = vset.pattern.permute.xlu0 0
        %444 = vperm.xlu0 %443, %v394
        %v445 = vpop.permute.xlu0 %444
        %448 = vset.pattern.permute.xlu0 0
        %449 = vperm.xlu0 %448, %v395
        %v450 = vpop.permute.xlu0 %449
        %453 = vset.pattern.permute.xlu0 0
        %454 = vperm.xlu0 %453, %v396
        %v455 = vpop.permute.xlu0 %454
        %458 = vset.pattern.permute.xlu0 0
        %459 = vperm.xlu0 %458, %v397
        %v460 = vpop.permute.xlu0 %459
        %463 = vset.pattern.permute.xlu0 0
        %464 = vperm.xlu0 %463, %v398
        %v465 = vpop.permute.xlu0 %464
        %468 = vset.pattern.permute.xlu0 0
        %469 = vperm.xlu0 %468, %v399
        %v470 = vpop.permute.xlu0 %469
        %473 = vset.pattern.permute.xlu0 0
        %474 = vperm.xlu0 %473, %v400
        %v475 = vpop.permute.xlu0 %474
        %478 = vset.pattern.permute.xlu0 0
        %479 = vperm.xlu0 %478, %v401
        %v480 = vpop.permute.xlu0 %479
        %v482 = vmul.f32 %v308, %v405
        %v483 = vmul.f32 %v313, %v410
        %v484 = vmul.f32 %v318, %v415
        %v485 = vmul.f32 %v323, %v420
        %v486 = vmul.f32 %v328, %v425
        %v487 = vmul.f32 %v333, %v430
        %v488 = vmul.f32 %v338, %v435
        %v489 = vmul.f32 %v343, %v440
        %v490 = vmul.f32 %v348, %v445
        %v491 = vmul.f32 %v353, %v450
        %v492 = vmul.f32 %v358, %v455
        %v493 = vmul.f32 %v363, %v460
        %v494 = vmul.f32 %v368, %v465
        %v495 = vmul.f32 %v373, %v470
        %v496 = vmul.f32 %v378, %v475
        %v497 = vmul.f32 %v383, %v480
        %v498 = vpack.c.bf16 %v483, %v482
        %v499 = vpack.c.bf16 %v485, %v484
        %v500 = vpack.c.bf16 %v487, %v486
        %v501 = vpack.c.bf16 %v489, %v488
        %v502 = vpack.c.bf16 %v491, %v490
        %v503 = vpack.c.bf16 %v493, %v492
        %v504 = vpack.c.bf16 %v495, %v494
        %v505 = vpack.c.bf16 %v497, %v496
        %v514 = vunpack.c.l.b16 %v498
        %v515 = vunpack.c.h.b16 %v498
        %v516 = vunpack.c.l.b16 %v499
        %v517 = vunpack.c.h.b16 %v499
        %v518 = vunpack.c.l.b16 %v500
        %v519 = vunpack.c.h.b16 %v500
        %v520 = vunpack.c.l.b16 %v501
        %v521 = vunpack.c.h.b16 %v501
        %v522 = vunpack.c.l.b16 %v502
        %v523 = vunpack.c.h.b16 %v502
        %v524 = vunpack.c.l.b16 %v503
        %v525 = vunpack.c.h.b16 %v503
        %v526 = vunpack.c.l.b16 %v504
        %v527 = vunpack.c.h.b16 %v504
        %v528 = vunpack.c.l.b16 %v505
        %v529 = vunpack.c.h.b16 %v505
        %v530 = vpack.c.b16 %v514, %v514
        %v531 = vpack.c.b16 %v515, %v515
        %v532 = vpack.c.b16 %v516, %v516
        %v533 = vpack.c.b16 %v517, %v517
        %v534 = vpack.c.b16 %v518, %v518
        %v535 = vpack.c.b16 %v519, %v519
        %v536 = vpack.c.b16 %v520, %v520
        %v537 = vpack.c.b16 %v521, %v521
        %v538 = vpack.c.b16 %v522, %v522
        %v539 = vpack.c.b16 %v523, %v523
        %v540 = vpack.c.b16 %v524, %v524
        %v541 = vpack.c.b16 %v525, %v525
        %v542 = vpack.c.b16 %v526, %v526
        %v543 = vpack.c.b16 %v527, %v527
        %v544 = vpack.c.b16 %v528, %v528
        %v545 = vpack.c.b16 %v529, %v529
        %562 = vst [vmem:[%s195] sm:$0xf] %v530
        %563 = vst [vmem:[%s195 + $0x4] sm:$0xf] %v531
        %564 = vst [vmem:[%s195 + $0x8] sm:$0xf] %v532
        %565 = vst [vmem:[%s195 + $0xc] sm:$0xf] %v533
        %566 = vst [vmem:[%s195 + $0x10] sm:$0xf] %v534
        %567 = vst [vmem:[%s195 + $0x14] sm:$0xf] %v535
        %568 = vst [vmem:[%s195 + $0x18] sm:$0xf] %v536
        %569 = vst [vmem:[%s195 + $0x1c] sm:$0xf] %v537
        %570 = vst [vmem:[%s195 + $0x20] sm:$0xf] %v538
        %571 = vst [vmem:[%s195 + $0x24] sm:$0xf] %v539
        %572 = vst [vmem:[%s195 + $0x28] sm:$0xf] %v540
        %573 = vst [vmem:[%s195 + $0x2c] sm:$0xf] %v541
        %574 = vst [vmem:[%s195 + $0x30] sm:$0xf] %v542
        %575 = vst [vmem:[%s195 + $0x34] sm:$0xf] %v543
        %576 = vst [vmem:[%s195 + $0x38] sm:$0xf] %v544
        %577 = vst [vmem:[%s195 + $0x3c] sm:$0xf] %v545
        %s578 = sand.u32 %s99, 1
        %s579 = scalar_lea.sflag [#allocation4], %s578
        %s580 = sand.u32 %s99, 1
        %s581 = smul.addr %s580, 64
        %s582 = scalar_lea.vmem [#allocation5], %s581
        // Predicated region
        $region37: #{tpu_custom_call.1} parent=31 // pred_check
          %p583 = pneg %p109
        $region38: #{tpu_custom_call.1} parent=31 // pred_check_branch
          %585 = sbr.rel (%p583) target = $region40
        $region39: #{tpu_custom_call.1} parent=31 // pred_region
          %s586 = smul.u32 16, %s18
          %s588 = ssub.s32 1024, 1024
          %589 = vsyncadd %s579, %s588
          %s590 = smul.addr %s586, 64
          %s591 = scalar_lea.hbm %s3, %s590
          %s592 = sshll.u32 %s582, 4
          %s593 = int_to_ptr.vmem [resolvable:$true] %s592
          %598 = dma.vmem_to_hbm [thread:$0]  %s593, 1024, %s591, %s579, 64, 64, 4
        $region40: #{tpu_custom_call.1} parent=31 // pred_fallthru
          _
      $region32: #{tpu_custom_call.1} parent=5 // pred_fallthru
        _
      %p599 = scmp.le.s32.totalorder 2, %s13
      // Predicated region
      $region41: #{tpu_custom_call.1} parent=5 // pred_check
        %p600 = pneg %p599
      $region42: #{tpu_custom_call.1} parent=5 // pred_check_branch
        %602 = sbr.rel (%p600) target = $region44
      $region43: #{tpu_custom_call.1} parent=5 // pred_region
        %s603 = ssub.s32 %s13, 2
        // Predicated region
        $region45: #{tpu_custom_call.1} parent=43 // pred_check
          %p604 = pneg %p115
        $region46: #{tpu_custom_call.1} parent=43 // pred_check_branch
          %606 = sbr.rel (%p604) target = $region48
        $region47: #{tpu_custom_call.1} parent=43 // pred_region
          %s607 = sand.u32 %s100, 1
          %s608 = scalar_lea.sflag [#allocation4], %s607
          %s609 = sand.u32 %s100, 1
          %s610 = smul.addr %s609, 64
          %s611 = scalar_lea.vmem [#allocation5], %s610
          %612 = dma.done %s608, 1024
        $region48: #{tpu_custom_call.1} parent=43 // pred_fallthru
          _
      $region44: #{tpu_custom_call.1} parent=5 // pred_fallthru
        _
    $region6: #{tpu_custom_call.1} parent=1 // loop_footer
      %s17 = sadd.s32 1, %s13
    $region7: #{tpu_custom_call.1} parent=1 // loop_footer_branch
      %12 = sbr.rel target = $region3
    $region8: #{tpu_custom_call.1} parent=1 // loop_exit
      _
    %613 = vsyncpa [#allocation3], 1
    %s614 = scalar_lea.sflag [#allocation3], 1
    %615 = vsyncpa %s614, 1
    %616 = vsyncpa [#allocation4], 1
    %s617 = scalar_lea.sflag [#allocation4], 1
    %618 = vsyncpa %s617, 1

</llo_original>
